<compile_context>
chip_gen: v6e
topology: v6e:2x2x1
jax: 0.10.0
libtpu: 0.0.40
codegen_flags: <defaults>
</compile_context>

<pallas_src>
import jax
import jax.numpy as jnp
from jax.experimental import pallas as pl
from jax.experimental.pallas import tpu as pltpu

_SUBLANE = 8     # f32 sublane tile
_LANE = 128      # lane tile
_BM_MAX = 512    # max batch-row tile (per-step overhead amortized)


def _round_up(x, m):
    return (x + m - 1) // m * m


def _batch_tiling(B):
    """Pick a row tile BM (multiple of 8, <= _BM_MAX) and the grid size.

    For B >= 16 we force at least 2 grid steps so the 'parallel' batch axis
    can shard across v7x's two TensorCores (no-op on single-TC v5e/v6e).
    """
    if B >= 16:
        bm = min(_BM_MAX, _round_up(pl.cdiv(B, 2), _SUBLANE))
    else:
        bm = min(_BM_MAX, _round_up(max(B, 1), _SUBLANE))
    grid = pl.cdiv(B, bm)
    return bm, grid


# --------------------------- kernels ----------------------------------------

def _encode_kernel(x_ref, we_ref, be_ref, z_ref):
    """Z = X @ We + be   (x f32 cast to bf16 in-kernel, f32 accumulation)."""
    x = x_ref[...].astype(jnp.bfloat16)
    z = jnp.dot(x, we_ref[...], preferred_element_type=jnp.float32)
    z_ref[...] = z + be_ref[...]          # (BM,Dp) + (1,Dp) broadcast-add


def _decode_kernel(z_ref, wd_ref, bd_ref, y_ref):
    """Y = Z @ Wd + bd."""
    z = z_ref[...].astype(jnp.bfloat16)
    y = jnp.dot(z, wd_ref[...], preferred_element_type=jnp.float32)
    y_ref[...] = y + bd_ref[...]          # (BM,K) + (1,K) broadcast-add


def _forward_kernel(x_ref, we_ref, be_ref, wd_ref, bd_ref, y_ref):
    """Fused encode->decode, single recon output (no Z writeback)."""
    x = x_ref[...].astype(jnp.bfloat16)
    z = jnp.dot(x, we_ref[...], preferred_element_type=jnp.float32) + be_ref[...]
    y = jnp.dot(z.astype(jnp.bfloat16), wd_ref[...],
                preferred_element_type=jnp.float32)
    y_ref[...] = y + bd_ref[...]


# --------------------------- pallas_call wrappers ----------------------------

def _pallas_encode(x_flat, We, be):
    """x_flat [B,K] f32, We [K,Dp] bf16, be [1,Dp] f32 -> Z [B,Dp] f32."""
    B, K = x_flat.shape
    Dp = We.shape[1]
    BM, grid = _batch_tiling(B)

    cost = pl.CostEstimate(
        flops=2 * B * K * Dp, transcendentals=0,
        bytes_accessed=x_flat.size * 4 + We.size * 2 + be.size * 4 + B * Dp * 4)

    return pl.pallas_call(
        _encode_kernel,
        out_shape=jax.ShapeDtypeStruct((B, Dp), jnp.float32),
        grid_spec=pltpu.PrefetchScalarGridSpec(
            num_scalar_prefetch=0, grid=(grid,),
            in_specs=[
                pl.BlockSpec((BM, K), lambda i: (i, 0)),   # x tile (f32)
                pl.BlockSpec((K, Dp), lambda i: (0, 0)),   # We pinned
                pl.BlockSpec((1, Dp), lambda i: (0, 0)),   # be pinned (1,Dp)
            ],
            out_specs=pl.BlockSpec((BM, Dp), lambda i: (i, 0)),
        ),
        compiler_params=pltpu.CompilerParams(
            dimension_semantics=("parallel",)),
        cost_estimate=cost,
    )(x_flat, We, be)


def _pallas_decode(z_pad, Wd, bd):
    """z_pad [B,Dp] f32, Wd [Dp,K] bf16, bd [1,K] f32 -> [B,K] f32."""
    B, Dp = z_pad.shape
    K = Wd.shape[1]
    BM, grid = _batch_tiling(B)

    cost = pl.CostEstimate(
        flops=2 * B * Dp * K, transcendentals=0,
        bytes_accessed=z_pad.size * 4 + Wd.size * 2 + bd.size * 4 + B * K * 4)

    return pl.pallas_call(
        _decode_kernel,
        out_shape=jax.ShapeDtypeStruct((B, K), jnp.float32),
        grid_spec=pltpu.PrefetchScalarGridSpec(
            num_scalar_prefetch=0, grid=(grid,),
            in_specs=[
                pl.BlockSpec((BM, Dp), lambda i: (i, 0)),  # z tile (f32)
                pl.BlockSpec((Dp, K), lambda i: (0, 0)),   # Wd pinned
                pl.BlockSpec((1, K), lambda i: (0, 0)),    # bd pinned (1,K)
            ],
            out_specs=pl.BlockSpec((BM, K), lambda i: (i, 0)),
        ),
        compiler_params=pltpu.CompilerParams(
            dimension_semantics=("parallel",)),
        cost_estimate=cost,
    )(z_pad, Wd, bd)


def _pallas_forward(x_flat, We, be, Wd, bd):
    """Fused encode+decode: x_flat [B,K] f32 -> recon [B,K] f32."""
    B, K = x_flat.shape
    Dp = We.shape[1]
    BM, grid = _batch_tiling(B)

    cost = pl.CostEstimate(
        flops=2 * B * K * Dp * 2, transcendentals=0,
        bytes_accessed=(x_flat.size * 4 + We.size * 2 + Wd.size * 2
                        + be.size * 4 + bd.size * 4 + B * K * 4))

    return pl.pallas_call(
        _forward_kernel,
        out_shape=jax.ShapeDtypeStruct((B, K), jnp.float32),
        grid_spec=pltpu.PrefetchScalarGridSpec(
            num_scalar_prefetch=0, grid=(grid,),
            in_specs=[
                pl.BlockSpec((BM, K), lambda i: (i, 0)),   # x tile (f32)
                pl.BlockSpec((K, Dp), lambda i: (0, 0)),   # We pinned
                pl.BlockSpec((1, Dp), lambda i: (0, 0)),   # be pinned
                pl.BlockSpec((Dp, K), lambda i: (0, 0)),   # Wd pinned
                pl.BlockSpec((1, K), lambda i: (0, 0)),    # bd pinned
            ],
            out_specs=pl.BlockSpec((BM, K), lambda i: (i, 0)),
        ),
        compiler_params=pltpu.CompilerParams(
            dimension_semantics=("parallel",)),
        cost_estimate=cost,
    )(x_flat, We, be, Wd, bd)


# --------------------------- model ------------------------------------------

class AbstractModelPallas:
    """Concrete JAX/Pallas counterpart of AbstractModel (linear autoencoder)."""

    def __init__(self, channels=4, height=16, width=16, latent=32, key=None):
        self.C, self.H, self.W = channels, height, width
        self.K = channels * height * width
        self.D = latent                             # logical latent dim
        self.Dp = _round_up(latent, _LANE)          # lane-dense padded latent
        if key is None:
            key = jax.random.PRNGKey(0)
        k1, k2, k3, k4 = jax.random.split(key, 4)
        s_e = 1.0 / jnp.sqrt(jnp.float32(self.K))
        s_d = 1.0 / jnp.sqrt(jnp.float32(self.D))
        # Zero-padded (D -> Dp) weights; weights stored bf16, biases f32.
        we = jax.random.uniform(k1, (self.K, self.D), jnp.float32, -s_e, s_e)
        wd = jax.random.uniform(k3, (self.D, self.K), jnp.float32, -s_d, s_d)
        self.We = jnp.zeros((self.K, self.Dp), jnp.float32
                            ).at[:, :self.D].set(we).astype(jnp.bfloat16)
        self.Wd = jnp.zeros((self.Dp, self.K), jnp.float32
                            ).at[:self.D, :].set(wd).astype(jnp.bfloat16)
        self.be = jnp.zeros((1, self.Dp), jnp.float32).at[:, :self.D].set(
            jax.random.uniform(k2, (1, self.D), jnp.float32, -s_e, s_e))
        self.bd = jax.random.uniform(k4, (1, self.K), jnp.float32, -s_d, s_d)

    # --- interface methods -------------------------------------------------
    def preprocess(self, x):
        return x  # identity, as in the base class

    def postprocess(self, x):
        return x  # identity, as in the base class

    def latent_dim(self):
        return self.D

    def encode(self, x):
        B = x.shape[0]
        x_flat = x.reshape(B, self.K).astype(jnp.float32)
        z_pad = _pallas_encode(x_flat, self.We, self.be)
        return z_pad[:, :self.D]                    # logical [B, D]

    def latent_vector(self, x):
        return self.encode(x)

    def decode(self, Z):
        B, d = Z.shape
        z_pad = Z.astype(jnp.float32)
        if d < self.Dp:
            z_pad = jnp.pad(z_pad, ((0, 0), (0, self.Dp - d)))
        y = _pallas_decode(z_pad, self.Wd, self.bd)
        return y.reshape(B, self.C, self.H, self.W)

    def sample(self, Z):
        return Z  # deterministic latent manifold (identity sampling)

    def swap_channels(self, Z1, Z2, C):
        idx = jnp.zeros((Z1.shape[-1],), dtype=bool
                        ).at[jnp.asarray(list(C))].set(True)
        return jnp.where(idx[None, :], Z2, Z1)

    def forward(self, x):
        x = self.preprocess(x)
        B = x.shape[0]
        x_flat = x.reshape(B, self.K).astype(jnp.float32)
        recon = _pallas_forward(x_flat, self.We, self.be, self.Wd, self.bd)
        out = recon.reshape(B, self.C, self.H, self.W)
        return self.postprocess(out)

    __call__ = forward


if __name__ == "__main__":
    key = jax.random.PRNGKey(0)
    k_x, k_p = jax.random.split(key)
    B, C, H, W = 2, 4, 16, 16
    x = jax.random.normal(k_x, (B, C, H, W), dtype=jnp.float32)

    model = AbstractModelPallas(channels=C, height=H, width=W, latent=32, key=k_p)

    out = model.forward(x)
    out = jax.block_until_ready(out)

    # Pure-JAX reference mirroring the kernel math (bf16 operands, f32 accum).
    x_flat = x.reshape(B, -1)
    xb = x_flat.astype(jnp.bfloat16).astype(jnp.float32)
    We32 = model.We.astype(jnp.float32)
    Wd32 = model.Wd.astype(jnp.float32)
    z_ref = xb @ We32 + model.be                                   # [B, Dp]
    y_ref = (z_ref.astype(jnp.bfloat16).astype(jnp.float32) @ Wd32
             + model.bd).reshape(B, C, H, W)

    assert out.shape == (B, C, H, W)
    assert jnp.allclose(out, y_ref, atol=2e-3, rtol=2e-3)

    # Encode-only and decode-only paths (lane-dense padded latent internally).
    z = jax.block_until_ready(model.encode(x))
    assert z.shape == (B, model.latent_dim())
    assert jnp.allclose(z, z_ref[:, :model.latent_dim()], atol=2e-3, rtol=2e-3)
    recon2 = jax.block_until_ready(model.decode(z))
    assert jnp.allclose(recon2, y_ref, atol=2e-3, rtol=2e-3)

    print("KERNEL_OK")
</pallas_src>

<mosaic_0001>
module attributes {stable_mosaic.version = 11 : i64} {
  func.func @_forward_kernel(%arg0: i32, %arg1: memref<8x1024xf32, #tpu.memory_space<vmem>>, %arg2: memref<1024x128xbf16, #tpu.memory_space<vmem>>, %arg3: memref<1x128xf32, #tpu.memory_space<vmem>>, %arg4: memref<128x1024xbf16, #tpu.memory_space<vmem>>, %arg5: memref<1x1024xf32, #tpu.memory_space<vmem>>, %arg6: memref<8x1024xf32, #tpu.memory_space<vmem>>) attributes {dimension_semantics = [#tpu.dimension_semantics<parallel>], iteration_bounds = array<i64: 1>, scalar_prefetch = 0 : i64, scratch_operands = 0 : i64, tpu.core_type = #tpu.core_type<tc>, window_params = [{transform_indices = @transform_0, window_bounds = array<i64: 8, 1024>}, {pipeline_mode = #tpu.pipeline_mode<synchronous>, transform_indices = @transform_1, window_bounds = array<i64: 1024, 128>}, {pipeline_mode = #tpu.pipeline_mode<synchronous>, transform_indices = @transform_2, window_bounds = array<i64: 1, 128>}, {pipeline_mode = #tpu.pipeline_mode<synchronous>, transform_indices = @transform_3, window_bounds = array<i64: 128, 1024>}, {pipeline_mode = #tpu.pipeline_mode<synchronous>, transform_indices = @transform_4, window_bounds = array<i64: 1, 1024>}, {transform_indices = @transform_5, window_bounds = array<i64: 8, 1024>}]} {
    %c0 = arith.constant 0 : index
    %c0_0 = arith.constant 0 : index
    %0 = vector.load %arg1[%c0, %c0_0] : memref<8x1024xf32, #tpu.memory_space<vmem>>, vector<8x1024xf32>
    %1 = arith.truncf %0 : vector<8x1024xf32> to vector<8x1024xbf16>
    %c0_1 = arith.constant 0 : index
    %c0_2 = arith.constant 0 : index
    %2 = vector.load %arg2[%c0_1, %c0_2] : memref<1024x128xbf16, #tpu.memory_space<vmem>>, vector<1024x128xbf16>
    %cst = arith.constant dense<0.000000e+00> : vector<8x128xf32>
    %3 = tpu.matmul %1, %2, %cst {dimension_numbers = #tpu.dot_dimension_numbers<[1], [0], [0], [1], [0, 0, 1, 1], [], []>} : vector<8x1024xbf16>, vector<1024x128xbf16>, vector<8x128xf32> -> vector<8x128xf32>
    %c0_3 = arith.constant 0 : index
    %c0_4 = arith.constant 0 : index
    %4 = vector.load %arg3[%c0_3, %c0_4] : memref<1x128xf32, #tpu.memory_space<vmem>>, vector<1x128xf32>
    %5 = vector.broadcast %4 : vector<1x128xf32> to vector<8x128xf32>
    %6 = arith.addf %3, %5 : vector<8x128xf32>
    %7 = arith.truncf %6 : vector<8x128xf32> to vector<8x128xbf16>
    %c0_5 = arith.constant 0 : index
    %c0_6 = arith.constant 0 : index
    %8 = vector.load %arg4[%c0_5, %c0_6] : memref<128x1024xbf16, #tpu.memory_space<vmem>>, vector<128x1024xbf16>
    %cst_7 = arith.constant dense<0.000000e+00> : vector<8x1024xf32>
    %9 = tpu.matmul %7, %8, %cst_7 {dimension_numbers = #tpu.dot_dimension_numbers<[1], [0], [0], [1], [0, 0, 1, 1], [], []>} : vector<8x128xbf16>, vector<128x1024xbf16>, vector<8x1024xf32> -> vector<8x1024xf32>
    %c0_8 = arith.constant 0 : index
    %c0_9 = arith.constant 0 : index
    %10 = vector.load %arg5[%c0_8, %c0_9] : memref<1x1024xf32, #tpu.memory_space<vmem>>, vector<1x1024xf32>
    %11 = vector.broadcast %10 : vector<1x1024xf32> to vector<8x1024xf32>
    %12 = arith.addf %9, %11 : vector<8x1024xf32>
    %c0_10 = arith.constant 0 : index
    %c0_11 = arith.constant 0 : index
    %13 = vector.load %arg6[%c0_10, %c0_11] : memref<8x1024xf32, #tpu.memory_space<vmem>>, vector<8x1024xf32>
    tpu.vector_store %arg6[%c0_10, %c0_11], %12 {strides = array<i32>} : memref<8x1024xf32, #tpu.memory_space<vmem>>, vector<8x1024xf32>,
    return
  }
  func.func @transform_0(%arg0: i32) -> (i32, i32) {
    %c0_i32 = arith.constant 0 : i32
    %c0_i32_0 = arith.constant 0 : i32
    return %arg0, %c0_i32 : i32, i32
  }
  func.func @transform_1(%arg0: i32) -> (i32, i32) {
    %c0_i32 = arith.constant 0 : i32
    %c0_i32_0 = arith.constant 0 : i32
    %c0_i32_1 = arith.constant 0 : i32
    return %c0_i32, %c0_i32_0 : i32, i32
  }
  func.func @transform_2(%arg0: i32) -> (i32, i32) {
    %c0_i32 = arith.constant 0 : i32
    %c0_i32_0 = arith.constant 0 : i32
    %c0_i32_1 = arith.constant 0 : i32
    return %c0_i32, %c0_i32_0 : i32, i32
  }
  func.func @transform_3(%arg0: i32) -> (i32, i32) {
    %c0_i32 = arith.constant 0 : i32
    %c0_i32_0 = arith.constant 0 : i32
    %c0_i32_1 = arith.constant 0 : i32
    return %c0_i32, %c0_i32_0 : i32, i32
  }
  func.func @transform_4(%arg0: i32) -> (i32, i32) {
    %c0_i32 = arith.constant 0 : i32
    %c0_i32_0 = arith.constant 0 : i32
    %c0_i32_1 = arith.constant 0 : i32
    return %c0_i32, %c0_i32_0 : i32, i32
  }
  func.func @transform_5(%arg0: i32) -> (i32, i32) {
    %c0_i32 = arith.constant 0 : i32
    %c0_i32_0 = arith.constant 0 : i32
    return %arg0, %c0_i32 : i32, i32
  }
}

</mosaic_0001>

<llo_original>
// kernel: tpu_custom_call.1
$region0: #{tpu_custom_call.1}
  #allocation0 [shape = 'u32[]', space=smem, size = 0x4, offset = 0x4, fixed_abs, tag = 'smem constant byte address 0x4 - core index']
  #allocation1 [shape = 'u32[144,128]{1,0:T(1,128)}', space=vmem, size = 0x12000, scoped, tag = 'internal scratch']
  %s0 = inlined_call_operand.hbm [shape: f32[2,1024], index: 0, kind: input, shape index: {}]
  %s1 = inlined_call_operand.hbm [shape: bf16[1024,128], index: 1, kind: input, shape index: {}]
  %s2 = inlined_call_operand.vmem [shape: f32[1,128], index: 2, kind: input, shape index: {}]
  %s3 = inlined_call_operand.hbm [shape: bf16[128,1024], index: 3, kind: input, shape index: {}]
  %s4 = inlined_call_operand.hbm [shape: f32[1,1024], index: 4, kind: input, shape index: {}]
  %s5 = inlined_call_operand.hbm [shape: f32[2,1024], index: 5, kind: output, shape index: {}]
  %s6 = sld [smem:[#allocation0]]
  $region46: #{tpu_custom_call.1} parent=0
    _
  %s8 = ssub.s32 1, %s6
  %s9 = scalar_select 0, %s8, %s6
  $region1: #{tpu_custom_call.1} parent=0
    #allocation2 [shape = 'u8[32768]{0}', space=vmem, size = 0x8000, scoped, tag = 'input window, operand 0, single buffered']
    #allocation3 [shape = 's32[1]{0}', space=sflag, size = 0x4, scoped, tag = 'scoped memory for tpu_custom_call.1']
    #allocation4 [shape = 's32[1]{0}', space=sflag, size = 0x4, scoped, tag = 'scoped memory for tpu_custom_call.1']
    #allocation5 [shape = 'u8[262144]{0}', space=vmem, size = 0x40000, scoped, tag = 'input window, operand 1, single buffered']
    #allocation6 [shape = 's32[1]{0}', space=sflag, size = 0x4, scoped, tag = 'scoped memory for tpu_custom_call.1']
    #allocation7 [shape = 'u8[262144]{0}', space=vmem, size = 0x40000, scoped, tag = 'input window, operand 3, single buffered']
    #allocation8 [shape = 'u8[4096]{0}', space=vmem, size = 0x1000, scoped, tag = 'input window, operand 4, single buffered']
    #allocation9 [shape = 's32[1]{0}', space=sflag, size = 0x4, scoped, tag = 'scoped memory for tpu_custom_call.1']
    #allocation10 [shape = 'u8[32768]{0}', space=vmem, size = 0x8000, scoped, tag = 'output window, operand 0, single buffered']
    %10 = vsyncpa [#allocation3], 0
    %11 = vsyncpa [#allocation6], 0
    %12 = vsyncpa [#allocation9], 0
    %13 = vsyncpa [#allocation4], 0
    // Predicated region
    $region2: #{tpu_custom_call.1} parent=1 // pred_check
      _
    $region3: #{tpu_custom_call.1} parent=1 // pred_check_branch
      %15 = sbr.rel (0) target = $region5
    $region4: #{tpu_custom_call.1} parent=1 // pred_region
      %s17 = ssub.s32 1024, 256
      %18 = vsyncadd [#allocation3], %s17
      %s19 = sshll.u32 [#allocation2], 4
      %s20 = int_to_ptr.vmem [resolvable:$true] %s19
      %25 = dma.hbm_to_vmem [thread:$0]  %s0, 256, %s20, [#allocation3], 256, 256, 16
    $region5: #{tpu_custom_call.1} parent=1 // pred_fallthru
      _
    // Predicated region
    $region6: #{tpu_custom_call.1} parent=1 // pred_check
      _
    $region7: #{tpu_custom_call.1} parent=1 // pred_check_branch
      %27 = sbr.rel (0) target = $region9
    $region8: #{tpu_custom_call.1} parent=1 // pred_region
      %s29 = ssub.s32 8192, 8192
      %30 = vsyncadd [#allocation6], %s29
      %s31 = sshll.u32 [#allocation5], 4
      %s32 = int_to_ptr.vmem [resolvable:$true] %s31
      %37 = dma.hbm_to_vmem [thread:$0]  %s1, 8192, %s32, [#allocation6], 64, 64, 4
    $region9: #{tpu_custom_call.1} parent=1 // pred_fallthru
      _
    // Predicated region
    $region10: #{tpu_custom_call.1} parent=1 // pred_check
      _
    $region11: #{tpu_custom_call.1} parent=1 // pred_check_branch
      %39 = sbr.rel (0) target = $region13
    $region12: #{tpu_custom_call.1} parent=1 // pred_region
      _
    $region13: #{tpu_custom_call.1} parent=1 // pred_fallthru
      _
    // Predicated region
    $region14: #{tpu_custom_call.1} parent=1 // pred_check
      _
    $region15: #{tpu_custom_call.1} parent=1 // pred_check_branch
      %41 = sbr.rel (0) target = $region17
    $region16: #{tpu_custom_call.1} parent=1 // pred_region
      %s43 = ssub.s32 8192, 8192
      %44 = vsyncadd [#allocation6], %s43
      %s45 = sshll.u32 [#allocation7], 4
      %s46 = int_to_ptr.vmem [resolvable:$true] %s45
      %51 = dma.hbm_to_vmem [thread:$0]  %s3, 8192, %s46, [#allocation6], 512, 512, 32
    $region17: #{tpu_custom_call.1} parent=1 // pred_fallthru
      _
    // Predicated region
    $region18: #{tpu_custom_call.1} parent=1 // pred_check
      _
    $region19: #{tpu_custom_call.1} parent=1 // pred_check_branch
      %53 = sbr.rel (0) target = $region21
    $region20: #{tpu_custom_call.1} parent=1 // pred_region
      %s55 = ssub.s32 128, 128
      %56 = vsyncadd [#allocation9], %s55
      %s58 = sshll.u32 [#allocation8], 4
      %s59 = int_to_ptr.vmem [resolvable:$true] %s58
      %61 = dma.hbm_to_vmem [thread:$0]  %s4, 128, %s59, [#allocation9]
    $region21: #{tpu_custom_call.1} parent=1 // pred_fallthru
      _
    // Predicated region
    $region22: #{tpu_custom_call.1} parent=1 // pred_check
      _
    $region23: #{tpu_custom_call.1} parent=1 // pred_check_branch
      %63 = sbr.rel (0) target = $region25
    $region24: #{tpu_custom_call.1} parent=1 // pred_region
      %64 = dma.done [#allocation3], 1024
    $region25: #{tpu_custom_call.1} parent=1 // pred_fallthru
      _
    // Predicated region
    $region26: #{tpu_custom_call.1} parent=1 // pred_check
      _
    $region27: #{tpu_custom_call.1} parent=1 // pred_check_branch
      %66 = sbr.rel (0) target = $region29
    $region28: #{tpu_custom_call.1} parent=1 // pred_region
      %67 = dma.done [#allocation6], 8192
    $region29: #{tpu_custom_call.1} parent=1 // pred_fallthru
      _
    // Predicated region
    $region30: #{tpu_custom_call.1} parent=1 // pred_check
      _
    $region31: #{tpu_custom_call.1} parent=1 // pred_check_branch
      %69 = sbr.rel (0) target = $region33
    $region32: #{tpu_custom_call.1} parent=1 // pred_region
      %70 = dma.done [#allocation6], 8192
    $region33: #{tpu_custom_call.1} parent=1 // pred_fallthru
      _
    // Predicated region
    $region34: #{tpu_custom_call.1} parent=1 // pred_check
      _
    $region35: #{tpu_custom_call.1} parent=1 // pred_check_branch
      %72 = sbr.rel (0) target = $region37
    $region36: #{tpu_custom_call.1} parent=1 // pred_region
      %73 = dma.done [#allocation9], 128
    $region37: #{tpu_custom_call.1} parent=1 // pred_fallthru
      _
    %v75 = vld [vmem:[#allocation2] sm:$0xff]
    %v76 = vld [vmem:[#allocation2 + $0x8] sm:$0xff]
    %v77 = vld [vmem:[#allocation2 + $0x10] sm:$0xff]
    %v78 = vld [vmem:[#allocation2 + $0x18] sm:$0xff]
    %v79 = vld [vmem:[#allocation2 + $0x20] sm:$0xff]
    %v80 = vld [vmem:[#allocation2 + $0x28] sm:$0xff]
    %v81 = vld [vmem:[#allocation2 + $0x30] sm:$0xff]
    %v82 = vld [vmem:[#allocation2 + $0x38] sm:$0xff]
    %v91 = vcombine.low %v75, %v77
    %v92 = vcombine.high %v75, %v77
    %v93 = vcombine.low %v79, %v81
    %v94 = vcombine.high %v79, %v81
    %v96 = vunpack.c.l.s4 1983009808
    %v97 = vunpack.c.0.s8 %v96
    %v98 = vlaneseq
    %v99 = vshrl.u32 %v98, 7
    %v100 = vsub.s32 %v97, %v99
    %v101 = vrot.slane %v91, %v100
    %v103 = vunpack.c.l.s4 1983009808
    %v104 = vunpack.c.0.s8 %v103
    %v105 = vlaneseq
    %v106 = vshrl.u32 %v105, 7
    %v107 = vsub.s32 %v104, %v106
    %v108 = vrot.slane %v92, %v107
    %v110 = vunpack.c.l.s4 1983009808
    %v111 = vunpack.c.0.s8 %v110
    %v112 = vlaneseq
    %v113 = vshrl.u32 %v112, 7
    %v114 = vsub.s32 %v111, %v113
    %v115 = vrot.slane %v93, %v114
    %v117 = vunpack.c.l.s4 1983009808
    %v118 = vunpack.c.0.s8 %v117
    %v119 = vlaneseq
    %v120 = vshrl.u32 %v119, 7
    %v121 = vsub.s32 %v118, %v120
    %v122 = vrot.slane %v94, %v121
    %v123 = vcombine.low %v101, %v115
    %v124 = vcombine.high %v101, %v115
    %v125 = vcombine.low %v108, %v122
    %v126 = vcombine.high %v108, %v122
    %v127 = vcombine.low %v76, %v78
    %v128 = vcombine.high %v76, %v78
    %v129 = vcombine.low %v80, %v82
    %v130 = vcombine.high %v80, %v82
    %v132 = vunpack.c.l.s4 1983009808
    %v133 = vunpack.c.0.s8 %v132
    %v134 = vlaneseq
    %v135 = vshrl.u32 %v134, 7
    %v136 = vsub.s32 %v133, %v135
    %v137 = vrot.slane %v127, %v136
    %v139 = vunpack.c.l.s4 1983009808
    %v140 = vunpack.c.0.s8 %v139
    %v141 = vlaneseq
    %v142 = vshrl.u32 %v141, 7
    %v143 = vsub.s32 %v140, %v142
    %v144 = vrot.slane %v128, %v143
    %v146 = vunpack.c.l.s4 1983009808
    %v147 = vunpack.c.0.s8 %v146
    %v148 = vlaneseq
    %v149 = vshrl.u32 %v148, 7
    %v150 = vsub.s32 %v147, %v149
    %v151 = vrot.slane %v129, %v150
    %v153 = vunpack.c.l.s4 1983009808
    %v154 = vunpack.c.0.s8 %v153
    %v155 = vlaneseq
    %v156 = vshrl.u32 %v155, 7
    %v157 = vsub.s32 %v154, %v156
    %v158 = vrot.slane %v130, %v157
    %v159 = vcombine.low %v137, %v151
    %v160 = vcombine.high %v137, %v151
    %v161 = vcombine.low %v144, %v158
    %v162 = vcombine.high %v144, %v158
    %v171 = vpack.c.bf16 %v123, %v123
    %v172 = vpack.c.bf16 %v124, %v124
    %v173 = vpack.c.bf16 %v125, %v125
    %v174 = vpack.c.bf16 %v126, %v126
    %v175 = vpack.c.bf16 %v159, %v159
    %v176 = vpack.c.bf16 %v160, %v160
    %v177 = vpack.c.bf16 %v161, %v161
    %v178 = vpack.c.bf16 %v162, %v162
    %v179 = vld [vmem:[#allocation5] sm:$0xf]
    %v180 = vld [vmem:[#allocation5 + $0x4] sm:$0xf]
    %v181 = vld [vmem:[#allocation5 + $0x8] sm:$0xf]
    %v182 = vld [vmem:[#allocation5 + $0xc] sm:$0xf]
    %v183 = vld [vmem:[#allocation5 + $0x10] sm:$0xf]
    %v184 = vld [vmem:[#allocation5 + $0x14] sm:$0xf]
    %v185 = vld [vmem:[#allocation5 + $0x18] sm:$0xf]
    %v186 = vld [vmem:[#allocation5 + $0x1c] sm:$0xf]
    %v187 = vld [vmem:[#allocation5 + $0x20] sm:$0xf]
    %v188 = vld [vmem:[#allocation5 + $0x24] sm:$0xf]
    %v189 = vld [vmem:[#allocation5 + $0x28] sm:$0xf]
    %v190 = vld [vmem:[#allocation5 + $0x2c] sm:$0xf]
    %v191 = vld [vmem:[#allocation5 + $0x30] sm:$0xf]
    %v192 = vld [vmem:[#allocation5 + $0x34] sm:$0xf]
    %v193 = vld [vmem:[#allocation5 + $0x38] sm:$0xf]
    %v194 = vld [vmem:[#allocation5 + $0x3c] sm:$0xf]
    %v195 = vld [vmem:[#allocation5 + $0x40] sm:$0xf]
    %v196 = vld [vmem:[#allocation5 + $0x44] sm:$0xf]
    %v197 = vld [vmem:[#allocation5 + $0x48] sm:$0xf]
    %v198 = vld [vmem:[#allocation5 + $0x4c] sm:$0xf]
    %v199 = vld [vmem:[#allocation5 + $0x50] sm:$0xf]
    %v200 = vld [vmem:[#allocation5 + $0x54] sm:$0xf]
    %v201 = vld [vmem:[#allocation5 + $0x58] sm:$0xf]
    %v202 = vld [vmem:[#allocation5 + $0x5c] sm:$0xf]
    %v203 = vld [vmem:[#allocation5 + $0x60] sm:$0xf]
    %v204 = vld [vmem:[#allocation5 + $0x64] sm:$0xf]
    %v205 = vld [vmem:[#allocation5 + $0x68] sm:$0xf]
    %v206 = vld [vmem:[#allocation5 + $0x6c] sm:$0xf]
    %v207 = vld [vmem:[#allocation5 + $0x70] sm:$0xf]
    %v208 = vld [vmem:[#allocation5 + $0x74] sm:$0xf]
    %v209 = vld [vmem:[#allocation5 + $0x78] sm:$0xf]
    %v210 = vld [vmem:[#allocation5 + $0x7c] sm:$0xf]
    %v211 = vld [vmem:[#allocation5 + $0x80] sm:$0xf]
    %v212 = vld [vmem:[#allocation5 + $0x84] sm:$0xf]
    %v213 = vld [vmem:[#allocation5 + $0x88] sm:$0xf]
    %v214 = vld [vmem:[#allocation5 + $0x8c] sm:$0xf]
    %v215 = vld [vmem:[#allocation5 + $0x90] sm:$0xf]
    %v216 = vld [vmem:[#allocation5 + $0x94] sm:$0xf]
    %v217 = vld [vmem:[#allocation5 + $0x98] sm:$0xf]
    %v218 = vld [vmem:[#allocation5 + $0x9c] sm:$0xf]
    %v219 = vld [vmem:[#allocation5 + $0xa0] sm:$0xf]
    %v220 = vld [vmem:[#allocation5 + $0xa4] sm:$0xf]
    %v221 = vld [vmem:[#allocation5 + $0xa8] sm:$0xf]
    %v222 = vld [vmem:[#allocation5 + $0xac] sm:$0xf]
    %v223 = vld [vmem:[#allocation5 + $0xb0] sm:$0xf]
    %v224 = vld [vmem:[#allocation5 + $0xb4] sm:$0xf]
    %v225 = vld [vmem:[#allocation5 + $0xb8] sm:$0xf]
    %v226 = vld [vmem:[#allocation5 + $0xbc] sm:$0xf]
    %v227 = vld [vmem:[#allocation5 + $0xc0] sm:$0xf]
    %v228 = vld [vmem:[#allocation5 + $0xc4] sm:$0xf]
    %v229 = vld [vmem:[#allocation5 + $0xc8] sm:$0xf]
    %v230 = vld [vmem:[#allocation5 + $0xcc] sm:$0xf]
    %v231 = vld [vmem:[#allocation5 + $0xd0] sm:$0xf]
    %v232 = vld [vmem:[#allocation5 + $0xd4] sm:$0xf]
    %v233 = vld [vmem:[#allocation5 + $0xd8] sm:$0xf]
    %v234 = vld [vmem:[#allocation5 + $0xdc] sm:$0xf]
    %v235 = vld [vmem:[#allocation5 + $0xe0] sm:$0xf]
    %v236 = vld [vmem:[#allocation5 + $0xe4] sm:$0xf]
    %v237 = vld [vmem:[#allocation5 + $0xe8] sm:$0xf]
    %v238 = vld [vmem:[#allocation5 + $0xec] sm:$0xf]
    %v239 = vld [vmem:[#allocation5 + $0xf0] sm:$0xf]
    %v240 = vld [vmem:[#allocation5 + $0xf4] sm:$0xf]
    %v241 = vld [vmem:[#allocation5 + $0xf8] sm:$0xf]
    %v242 = vld [vmem:[#allocation5 + $0xfc] sm:$0xf]
    %v243 = vld [vmem:[#allocation5 + $0x100] sm:$0xf]
    %v244 = vld [vmem:[#allocation5 + $0x104] sm:$0xf]
    %v245 = vld [vmem:[#allocation5 + $0x108] sm:$0xf]
    %v246 = vld [vmem:[#allocation5 + $0x10c] sm:$0xf]
    %v247 = vld [vmem:[#allocation5 + $0x110] sm:$0xf]
    %v248 = vld [vmem:[#allocation5 + $0x114] sm:$0xf]
    %v249 = vld [vmem:[#allocation5 + $0x118] sm:$0xf]
    %v250 = vld [vmem:[#allocation5 + $0x11c] sm:$0xf]
    %v251 = vld [vmem:[#allocation5 + $0x120] sm:$0xf]
    %v252 = vld [vmem:[#allocation5 + $0x124] sm:$0xf]
    %v253 = vld [vmem:[#allocation5 + $0x128] sm:$0xf]
    %v254 = vld [vmem:[#allocation5 + $0x12c] sm:$0xf]
    %v255 = vld [vmem:[#allocation5 + $0x130] sm:$0xf]
    %v256 = vld [vmem:[#allocation5 + $0x134] sm:$0xf]
    %v257 = vld [vmem:[#allocation5 + $0x138] sm:$0xf]
    %v258 = vld [vmem:[#allocation5 + $0x13c] sm:$0xf]
    %v259 = vld [vmem:[#allocation5 + $0x140] sm:$0xf]
    %v260 = vld [vmem:[#allocation5 + $0x144] sm:$0xf]
    %v261 = vld [vmem:[#allocation5 + $0x148] sm:$0xf]
    %v262 = vld [vmem:[#allocation5 + $0x14c] sm:$0xf]
    %v263 = vld [vmem:[#allocation5 + $0x150] sm:$0xf]
    %v264 = vld [vmem:[#allocation5 + $0x154] sm:$0xf]
    %v265 = vld [vmem:[#allocation5 + $0x158] sm:$0xf]
    %v266 = vld [vmem:[#allocation5 + $0x15c] sm:$0xf]
    %v267 = vld [vmem:[#allocation5 + $0x160] sm:$0xf]
    %v268 = vld [vmem:[#allocation5 + $0x164] sm:$0xf]
    %v269 = vld [vmem:[#allocation5 + $0x168] sm:$0xf]
    %v270 = vld [vmem:[#allocation5 + $0x16c] sm:$0xf]
    %v271 = vld [vmem:[#allocation5 + $0x170] sm:$0xf]
    %v272 = vld [vmem:[#allocation5 + $0x174] sm:$0xf]
    %v273 = vld [vmem:[#allocation5 + $0x178] sm:$0xf]
    %v274 = vld [vmem:[#allocation5 + $0x17c] sm:$0xf]
    %v275 = vld [vmem:[#allocation5 + $0x180] sm:$0xf]
    %v276 = vld [vmem:[#allocation5 + $0x184] sm:$0xf]
    %v277 = vld [vmem:[#allocation5 + $0x188] sm:$0xf]
    %v278 = vld [vmem:[#allocation5 + $0x18c] sm:$0xf]
    %v279 = vld [vmem:[#allocation5 + $0x190] sm:$0xf]
    %v280 = vld [vmem:[#allocation5 + $0x194] sm:$0xf]
    %v281 = vld [vmem:[#allocation5 + $0x198] sm:$0xf]
    %v282 = vld [vmem:[#allocation5 + $0x19c] sm:$0xf]
    %v283 = vld [vmem:[#allocation5 + $0x1a0] sm:$0xf]
    %v284 = vld [vmem:[#allocation5 + $0x1a4] sm:$0xf]
    %v285 = vld [vmem:[#allocation5 + $0x1a8] sm:$0xf]
    %v286 = vld [vmem:[#allocation5 + $0x1ac] sm:$0xf]
    %v287 = vld [vmem:[#allocation5 + $0x1b0] sm:$0xf]
    %v288 = vld [vmem:[#allocation5 + $0x1b4] sm:$0xf]
    %v289 = vld [vmem:[#allocation5 + $0x1b8] sm:$0xf]
    %v290 = vld [vmem:[#allocation5 + $0x1bc] sm:$0xf]
    %v291 = vld [vmem:[#allocation5 + $0x1c0] sm:$0xf]
    %v292 = vld [vmem:[#allocation5 + $0x1c4] sm:$0xf]
    %v293 = vld [vmem:[#allocation5 + $0x1c8] sm:$0xf]
    %v294 = vld [vmem:[#allocation5 + $0x1cc] sm:$0xf]
    %v295 = vld [vmem:[#allocation5 + $0x1d0] sm:$0xf]
    %v296 = vld [vmem:[#allocation5 + $0x1d4] sm:$0xf]
    %v297 = vld [vmem:[#allocation5 + $0x1d8] sm:$0xf]
    %v298 = vld [vmem:[#allocation5 + $0x1dc] sm:$0xf]
    %v299 = vld [vmem:[#allocation5 + $0x1e0] sm:$0xf]
    %v300 = vld [vmem:[#allocation5 + $0x1e4] sm:$0xf]
    %v301 = vld [vmem:[#allocation5 + $0x1e8] sm:$0xf]
    %v302 = vld [vmem:[#allocation5 + $0x1ec] sm:$0xf]
    %v303 = vld [vmem:[#allocation5 + $0x1f0] sm:$0xf]
    %v304 = vld [vmem:[#allocation5 + $0x1f4] sm:$0xf]
    %v305 = vld [vmem:[#allocation5 + $0x1f8] sm:$0xf]
    %v306 = vld [vmem:[#allocation5 + $0x1fc] sm:$0xf]
    %v307 = vld [vmem:[%s2] sm:$0x1]
    %v309 = vlaneseq
    %v310 = vshrl.u32 %v309, 7
    %v311 = vsub.s32 0, %v310
    %v312 = vrot.slane %v307, %v311
    %v442 = vunpack.c.l.b16 %v179
    %v443 = vunpack.c.l.b16 %v180
    %v444 = vunpack.c.l.b16 %v181
    %v445 = vunpack.c.l.b16 %v182
    %v446 = vunpack.c.l.b16 %v183
    %v447 = vunpack.c.l.b16 %v184
    %v448 = vunpack.c.l.b16 %v185
    %v449 = vunpack.c.l.b16 %v186
    %v450 = vunpack.c.l.b16 %v187
    %v451 = vunpack.c.l.b16 %v188
    %v452 = vunpack.c.l.b16 %v189
    %v453 = vunpack.c.l.b16 %v190
    %v454 = vunpack.c.l.b16 %v191
    %v455 = vunpack.c.l.b16 %v192
    %v456 = vunpack.c.l.b16 %v193
    %v457 = vunpack.c.l.b16 %v194
    %v458 = vunpack.c.l.b16 %v195
    %v459 = vunpack.c.l.b16 %v196
    %v460 = vunpack.c.l.b16 %v197
    %v461 = vunpack.c.l.b16 %v198
    %v462 = vunpack.c.l.b16 %v199
    %v463 = vunpack.c.l.b16 %v200
    %v464 = vunpack.c.l.b16 %v201
    %v465 = vunpack.c.l.b16 %v202
    %v466 = vunpack.c.l.b16 %v203
    %v467 = vunpack.c.l.b16 %v204
    %v468 = vunpack.c.l.b16 %v205
    %v469 = vunpack.c.l.b16 %v206
    %v470 = vunpack.c.l.b16 %v207
    %v471 = vunpack.c.l.b16 %v208
    %v472 = vunpack.c.l.b16 %v209
    %v473 = vunpack.c.l.b16 %v210
    %v474 = vunpack.c.l.b16 %v211
    %v475 = vunpack.c.l.b16 %v212
    %v476 = vunpack.c.l.b16 %v213
    %v477 = vunpack.c.l.b16 %v214
    %v478 = vunpack.c.l.b16 %v215
    %v479 = vunpack.c.l.b16 %v216
    %v480 = vunpack.c.l.b16 %v217
    %v481 = vunpack.c.l.b16 %v218
    %v482 = vunpack.c.l.b16 %v219
    %v483 = vunpack.c.l.b16 %v220
    %v484 = vunpack.c.l.b16 %v221
    %v485 = vunpack.c.l.b16 %v222
    %v486 = vunpack.c.l.b16 %v223
    %v487 = vunpack.c.l.b16 %v224
    %v488 = vunpack.c.l.b16 %v225
    %v489 = vunpack.c.l.b16 %v226
    %v490 = vunpack.c.l.b16 %v227
    %v491 = vunpack.c.l.b16 %v228
    %v492 = vunpack.c.l.b16 %v229
    %v493 = vunpack.c.l.b16 %v230
    %v494 = vunpack.c.l.b16 %v231
    %v495 = vunpack.c.l.b16 %v232
    %v496 = vunpack.c.l.b16 %v233
    %v497 = vunpack.c.l.b16 %v234
    %v498 = vunpack.c.l.b16 %v235
    %v499 = vunpack.c.l.b16 %v236
    %v500 = vunpack.c.l.b16 %v237
    %v501 = vunpack.c.l.b16 %v238
    %v502 = vunpack.c.l.b16 %v239
    %v503 = vunpack.c.l.b16 %v240
    %v504 = vunpack.c.l.b16 %v241
    %v505 = vunpack.c.l.b16 %v242
    %v506 = vunpack.c.l.b16 %v243
    %v507 = vunpack.c.l.b16 %v244
    %v508 = vunpack.c.l.b16 %v245
    %v509 = vunpack.c.l.b16 %v246
    %v510 = vunpack.c.l.b16 %v247
    %v511 = vunpack.c.l.b16 %v248
    %v512 = vunpack.c.l.b16 %v249
    %v513 = vunpack.c.l.b16 %v250
    %v514 = vunpack.c.l.b16 %v251
    %v515 = vunpack.c.l.b16 %v252
    %v516 = vunpack.c.l.b16 %v253
    %v517 = vunpack.c.l.b16 %v254
    %v518 = vunpack.c.l.b16 %v255
    %v519 = vunpack.c.l.b16 %v256
    %v520 = vunpack.c.l.b16 %v257
    %v521 = vunpack.c.l.b16 %v258
    %v522 = vunpack.c.l.b16 %v259
    %v523 = vunpack.c.l.b16 %v260
    %v524 = vunpack.c.l.b16 %v261
    %v525 = vunpack.c.l.b16 %v262
    %v526 = vunpack.c.l.b16 %v263
    %v527 = vunpack.c.l.b16 %v264
    %v528 = vunpack.c.l.b16 %v265
    %v529 = vunpack.c.l.b16 %v266
    %v530 = vunpack.c.l.b16 %v267
    %v531 = vunpack.c.l.b16 %v268
    %v532 = vunpack.c.l.b16 %v269
    %v533 = vunpack.c.l.b16 %v270
    %v534 = vunpack.c.l.b16 %v271
    %v535 = vunpack.c.l.b16 %v272
    %v536 = vunpack.c.l.b16 %v273
    %v537 = vunpack.c.l.b16 %v274
    %v538 = vunpack.c.l.b16 %v275
    %v539 = vunpack.c.l.b16 %v276
    %v540 = vunpack.c.l.b16 %v277
    %v541 = vunpack.c.l.b16 %v278
    %v542 = vunpack.c.l.b16 %v279
    %v543 = vunpack.c.l.b16 %v280
    %v544 = vunpack.c.l.b16 %v281
    %v545 = vunpack.c.l.b16 %v282
    %v546 = vunpack.c.l.b16 %v283
    %v547 = vunpack.c.l.b16 %v284
    %v548 = vunpack.c.l.b16 %v285
    %v549 = vunpack.c.l.b16 %v286
    %v550 = vunpack.c.l.b16 %v287
    %v551 = vunpack.c.l.b16 %v288
    %v552 = vunpack.c.l.b16 %v289
    %v553 = vunpack.c.l.b16 %v290
    %v554 = vunpack.c.l.b16 %v291
    %v555 = vunpack.c.l.b16 %v292
    %v556 = vunpack.c.l.b16 %v293
    %v557 = vunpack.c.l.b16 %v294
    %v558 = vunpack.c.l.b16 %v295
    %v559 = vunpack.c.l.b16 %v296
    %v560 = vunpack.c.l.b16 %v297
    %v561 = vunpack.c.l.b16 %v298
    %v562 = vunpack.c.l.b16 %v299
    %v563 = vunpack.c.l.b16 %v300
    %v564 = vunpack.c.l.b16 %v301
    %v565 = vunpack.c.l.b16 %v302
    %v566 = vunpack.c.l.b16 %v303
    %v567 = vunpack.c.l.b16 %v304
    %v568 = vunpack.c.l.b16 %v305
    %v569 = vunpack.c.l.b16 %v306
    %v570 = vpack.c.b16 %v443, %v442
    %v571 = vpack.c.b16 %v445, %v444
    %v572 = vpack.c.b16 %v447, %v446
    %v573 = vpack.c.b16 %v449, %v448
    %v574 = vpack.c.b16 %v451, %v450
    %v575 = vpack.c.b16 %v453, %v452
    %v576 = vpack.c.b16 %v455, %v454
    %v577 = vpack.c.b16 %v457, %v456
    %v578 = vpack.c.b16 %v459, %v458
    %v579 = vpack.c.b16 %v461, %v460
    %v580 = vpack.c.b16 %v463, %v462
    %v581 = vpack.c.b16 %v465, %v464
    %v582 = vpack.c.b16 %v467, %v466
    %v583 = vpack.c.b16 %v469, %v468
    %v584 = vpack.c.b16 %v471, %v470
    %v585 = vpack.c.b16 %v473, %v472
    %v586 = vpack.c.b16 %v475, %v474
    %v587 = vpack.c.b16 %v477, %v476
    %v588 = vpack.c.b16 %v479, %v478
    %v589 = vpack.c.b16 %v481, %v480
    %v590 = vpack.c.b16 %v483, %v482
    %v591 = vpack.c.b16 %v485, %v484
    %v592 = vpack.c.b16 %v487, %v486
    %v593 = vpack.c.b16 %v489, %v488
    %v594 = vpack.c.b16 %v491, %v490
    %v595 = vpack.c.b16 %v493, %v492
    %v596 = vpack.c.b16 %v495, %v494
    %v597 = vpack.c.b16 %v497, %v496
    %v598 = vpack.c.b16 %v499, %v498
    %v599 = vpack.c.b16 %v501, %v500
    %v600 = vpack.c.b16 %v503, %v502
    %v601 = vpack.c.b16 %v505, %v504
    %v602 = vpack.c.b16 %v507, %v506
    %v603 = vpack.c.b16 %v509, %v508
    %v604 = vpack.c.b16 %v511, %v510
    %v605 = vpack.c.b16 %v513, %v512
    %v606 = vpack.c.b16 %v515, %v514
    %v607 = vpack.c.b16 %v517, %v516
    %v608 = vpack.c.b16 %v519, %v518
    %v609 = vpack.c.b16 %v521, %v520
    %v610 = vpack.c.b16 %v523, %v522
    %v611 = vpack.c.b16 %v525, %v524
    %v612 = vpack.c.b16 %v527, %v526
    %v613 = vpack.c.b16 %v529, %v528
    %v614 = vpack.c.b16 %v531, %v530
    %v615 = vpack.c.b16 %v533, %v532
    %v616 = vpack.c.b16 %v535, %v534
    %v617 = vpack.c.b16 %v537, %v536
    %v618 = vpack.c.b16 %v539, %v538
    %v619 = vpack.c.b16 %v541, %v540
    %v620 = vpack.c.b16 %v543, %v542
    %v621 = vpack.c.b16 %v545, %v544
    %v622 = vpack.c.b16 %v547, %v546
    %v623 = vpack.c.b16 %v549, %v548
    %v624 = vpack.c.b16 %v551, %v550
    %v625 = vpack.c.b16 %v553, %v552
    %v626 = vpack.c.b16 %v555, %v554
    %v627 = vpack.c.b16 %v557, %v556
    %v628 = vpack.c.b16 %v559, %v558
    %v629 = vpack.c.b16 %v561, %v560
    %v630 = vpack.c.b16 %v563, %v562
    %v631 = vpack.c.b16 %v565, %v564
    %v632 = vpack.c.b16 %v567, %v566
    %v633 = vpack.c.b16 %v569, %v568
    %698 = vmatprep.subr.bf16.mxu0 0
    %699 = vmatpush1.bf16.msra.mxu0 %v577
    %700 = vmatprep.subr.bf16.mxu0 0
    %701 = vmatpush1.bf16.msra.mxu0 %v576
    %702 = vmatprep.subr.bf16.mxu0 0
    %703 = vmatpush1.bf16.msra.mxu0 %v575
    %704 = vmatprep.subr.bf16.mxu0 0
    %705 = vmatpush1.bf16.msra.mxu0 %v574
    %706 = vmatprep.subr.bf16.mxu0 0
    %707 = vmatpush1.bf16.msra.mxu0 %v573
    %708 = vmatprep.subr.bf16.mxu0 0
    %709 = vmatpush1.bf16.msra.mxu0 %v572
    %710 = vmatprep.subr.bf16.mxu0 0
    %711 = vmatpush1.bf16.msra.mxu0 %v571
    %712 = vmatprep.subr.bf16.mxu0 0
    %713 = vmatpush1.bf16.msra.mxu0 %v570
    %714 = vmatprep.subr.bf16.mxu0 0
    %715 = vmatpush2.bf16.msra.mxu0 %v585
    %716 = vmatprep.subr.bf16.mxu0 0
    %717 = vmatpush2.bf16.msra.mxu0 %v584
    %718 = vmatprep.subr.bf16.mxu0 0
    %719 = vmatpush2.bf16.msra.mxu0 %v583
    %720 = vmatprep.subr.bf16.mxu0 0
    %721 = vmatpush2.bf16.msra.mxu0 %v582
    %722 = vmatprep.subr.bf16.mxu0 0
    %723 = vmatpush2.bf16.msra.mxu0 %v581
    %724 = vmatprep.subr.bf16.mxu0 0
    %725 = vmatpush2.bf16.msra.mxu0 %v580
    %726 = vmatprep.subr.bf16.mxu0 0
    %727 = vmatpush2.bf16.msra.mxu0 %v579
    %728 = vmatprep.subr.bf16.mxu0 0
    %729 = vmatpush2.bf16.msra.mxu0 %v578
    %730 = vmatprep.mubr.bf16.mxu0 %v172
    %731 = vmatmul.mubr.bf16.gmra.mxu0 %v171
    %v732 = vpop.f32.mrf.mxu0
    %v733 = vadd.f32 %v312, %v732
    %v734 = vpop.f32.mrf.mxu0
    %v735 = vpop.f32.mrf.mxu0
    %v736 = vpop.f32.mrf.mxu0
    %737 = vdwg.mxu0
    %738 = vmatprep.subr.bf16.mxu0 0
    %739 = vmatpush1.bf16.msra.mxu0 %v593
    %740 = vmatprep.subr.bf16.mxu0 0
    %741 = vmatpush1.bf16.msra.mxu0 %v592
    %742 = vmatprep.subr.bf16.mxu0 0
    %743 = vmatpush1.bf16.msra.mxu0 %v591
    %744 = vmatprep.subr.bf16.mxu0 0
    %745 = vmatpush1.bf16.msra.mxu0 %v590
    %746 = vmatprep.subr.bf16.mxu0 0
    %747 = vmatpush1.bf16.msra.mxu0 %v589
    %748 = vmatprep.subr.bf16.mxu0 0
    %749 = vmatpush1.bf16.msra.mxu0 %v588
    %750 = vmatprep.subr.bf16.mxu0 0
    %751 = vmatpush1.bf16.msra.mxu0 %v587
    %752 = vmatprep.subr.bf16.mxu0 0
    %753 = vmatpush1.bf16.msra.mxu0 %v586
    %754 = vmatprep.subr.bf16.mxu0 0
    %755 = vmatpush2.bf16.msra.mxu0 %v601
    %756 = vmatprep.subr.bf16.mxu0 0
    %757 = vmatpush2.bf16.msra.mxu0 %v600
    %758 = vmatprep.subr.bf16.mxu0 0
    %759 = vmatpush2.bf16.msra.mxu0 %v599
    %760 = vmatprep.subr.bf16.mxu0 0
    %761 = vmatpush2.bf16.msra.mxu0 %v598
    %762 = vmatprep.subr.bf16.mxu0 0
    %763 = vmatpush2.bf16.msra.mxu0 %v597
    %764 = vmatprep.subr.bf16.mxu0 0
    %765 = vmatpush2.bf16.msra.mxu0 %v596
    %766 = vmatprep.subr.bf16.mxu0 0
    %767 = vmatpush2.bf16.msra.mxu0 %v595
    %768 = vmatprep.subr.bf16.mxu0 0
    %769 = vmatpush2.bf16.msra.mxu0 %v594
    %770 = vmatprep.mubr.bf16.mxu0 %v174
    %771 = vmatmul.mubr.bf16.gmra.mxu0 %v173
    %v772 = vpop.f32.mrf.mxu0
    %v773 = vadd.f32 %v733, %v772
    %v774 = vpop.f32.mrf.mxu0
    %v775 = vpop.f32.mrf.mxu0
    %v776 = vpop.f32.mrf.mxu0
    %777 = vdwg.mxu0
    %778 = vmatprep.subr.bf16.mxu0 0
    %779 = vmatpush1.bf16.msra.mxu0 %v609
    %780 = vmatprep.subr.bf16.mxu0 0
    %781 = vmatpush1.bf16.msra.mxu0 %v608
    %782 = vmatprep.subr.bf16.mxu0 0
    %783 = vmatpush1.bf16.msra.mxu0 %v607
    %784 = vmatprep.subr.bf16.mxu0 0
    %785 = vmatpush1.bf16.msra.mxu0 %v606
    %786 = vmatprep.subr.bf16.mxu0 0
    %787 = vmatpush1.bf16.msra.mxu0 %v605
    %788 = vmatprep.subr.bf16.mxu0 0
    %789 = vmatpush1.bf16.msra.mxu0 %v604
    %790 = vmatprep.subr.bf16.mxu0 0
    %791 = vmatpush1.bf16.msra.mxu0 %v603
    %792 = vmatprep.subr.bf16.mxu0 0
    %793 = vmatpush1.bf16.msra.mxu0 %v602
    %794 = vmatprep.subr.bf16.mxu0 0
    %795 = vmatpush2.bf16.msra.mxu0 %v617
    %796 = vmatprep.subr.bf16.mxu0 0
    %797 = vmatpush2.bf16.msra.mxu0 %v616
    %798 = vmatprep.subr.bf16.mxu0 0
    %799 = vmatpush2.bf16.msra.mxu0 %v615
    %800 = vmatprep.subr.bf16.mxu0 0
    %801 = vmatpush2.bf16.msra.mxu0 %v614
    %802 = vmatprep.subr.bf16.mxu0 0
    %803 = vmatpush2.bf16.msra.mxu0 %v613
    %804 = vmatprep.subr.bf16.mxu0 0
    %805 = vmatpush2.bf16.msra.mxu0 %v612
    %806 = vmatprep.subr.bf16.mxu0 0
    %807 = vmatpush2.bf16.msra.mxu0 %v611
    %808 = vmatprep.subr.bf16.mxu0 0
    %809 = vmatpush2.bf16.msra.mxu0 %v610
    %810 = vmatprep.mubr.bf16.mxu0 %v176
    %811 = vmatmul.mubr.bf16.gmra.mxu0 %v175
    %v812 = vpop.f32.mrf.mxu0
    %v813 = vadd.f32 %v773, %v812
    %v814 = vpop.f32.mrf.mxu0
    %v815 = vpop.f32.mrf.mxu0
    %v816 = vpop.f32.mrf.mxu0
    %817 = vdwg.mxu0
    %818 = vmatprep.subr.bf16.mxu0 0
    %819 = vmatpush1.bf16.msra.mxu0 %v625
    %820 = vmatprep.subr.bf16.mxu0 0
    %821 = vmatpush1.bf16.msra.mxu0 %v624
    %822 = vmatprep.subr.bf16.mxu0 0
    %823 = vmatpush1.bf16.msra.mxu0 %v623
    %824 = vmatprep.subr.bf16.mxu0 0
    %825 = vmatpush1.bf16.msra.mxu0 %v622
    %826 = vmatprep.subr.bf16.mxu0 0
    %827 = vmatpush1.bf16.msra.mxu0 %v621
    %828 = vmatprep.subr.bf16.mxu0 0
    %829 = vmatpush1.bf16.msra.mxu0 %v620
    %830 = vmatprep.subr.bf16.mxu0 0
    %831 = vmatpush1.bf16.msra.mxu0 %v619
    %832 = vmatprep.subr.bf16.mxu0 0
    %833 = vmatpush1.bf16.msra.mxu0 %v618
    %834 = vmatprep.subr.bf16.mxu0 0
    %835 = vmatpush2.bf16.msra.mxu0 %v633
    %836 = vmatprep.subr.bf16.mxu0 0
    %837 = vmatpush2.bf16.msra.mxu0 %v632
    %838 = vmatprep.subr.bf16.mxu0 0
    %839 = vmatpush2.bf16.msra.mxu0 %v631
    %840 = vmatprep.subr.bf16.mxu0 0
    %841 = vmatpush2.bf16.msra.mxu0 %v630
    %842 = vmatprep.subr.bf16.mxu0 0
    %843 = vmatpush2.bf16.msra.mxu0 %v629
    %844 = vmatprep.subr.bf16.mxu0 0
    %845 = vmatpush2.bf16.msra.mxu0 %v628
    %846 = vmatprep.subr.bf16.mxu0 0
    %847 = vmatpush2.bf16.msra.mxu0 %v627
    %848 = vmatprep.subr.bf16.mxu0 0
    %849 = vmatpush2.bf16.msra.mxu0 %v626
    %850 = vmatprep.mubr.bf16.mxu0 %v178
    %851 = vmatmul.mubr.bf16.gmra.mxu0 %v177
    %v852 = vpop.f32.mrf.mxu0
    %v853 = vadd.f32 %v813, %v852
    %v854 = vpop.f32.mrf.mxu0
    %v855 = vpop.f32.mrf.mxu0
    %v856 = vpop.f32.mrf.mxu0
    %857 = vdwg.mxu0
    %v858 = vpack.c.bf16 %v853, %v853
    %v859 = vld [vmem:[#allocation7] sm:$0xff]
    %v860 = vld [vmem:[#allocation7 + $0x8] sm:$0xff]
    %v861 = vld [vmem:[#allocation7 + $0x10] sm:$0xff]
    %v862 = vld [vmem:[#allocation7 + $0x18] sm:$0xff]
    %v863 = vld [vmem:[#allocation7 + $0x20] sm:$0xff]
    %v864 = vld [vmem:[#allocation7 + $0x28] sm:$0xff]
    %v865 = vld [vmem:[#allocation7 + $0x30] sm:$0xff]
    %v866 = vld [vmem:[#allocation7 + $0x38] sm:$0xff]
    %v867 = vld [vmem:[#allocation7 + $0x40] sm:$0xff]
    %v868 = vld [vmem:[#allocation7 + $0x48] sm:$0xff]
    %v869 = vld [vmem:[#allocation7 + $0x50] sm:$0xff]
    %v870 = vld [vmem:[#allocation7 + $0x58] sm:$0xff]
    %v871 = vld [vmem:[#allocation7 + $0x60] sm:$0xff]
    %v872 = vld [vmem:[#allocation7 + $0x68] sm:$0xff]
    %v873 = vld [vmem:[#allocation7 + $0x70] sm:$0xff]
    %v874 = vld [vmem:[#allocation7 + $0x78] sm:$0xff]
    %v875 = vld [vmem:[#allocation7 + $0x80] sm:$0xff]
    %v876 = vld [vmem:[#allocation7 + $0x88] sm:$0xff]
    %v877 = vld [vmem:[#allocation7 + $0x90] sm:$0xff]
    %v878 = vld [vmem:[#allocation7 + $0x98] sm:$0xff]
    %v879 = vld [vmem:[#allocation7 + $0xa0] sm:$0xff]
    %v880 = vld [vmem:[#allocation7 + $0xa8] sm:$0xff]
    %v881 = vld [vmem:[#allocation7 + $0xb0] sm:$0xff]
    %v882 = vld [vmem:[#allocation7 + $0xb8] sm:$0xff]
    %v883 = vld [vmem:[#allocation7 + $0xc0] sm:$0xff]
    %v884 = vld [vmem:[#allocation7 + $0xc8] sm:$0xff]
    %v885 = vld [vmem:[#allocation7 + $0xd0] sm:$0xff]
    %v886 = vld [vmem:[#allocation7 + $0xd8] sm:$0xff]
    %v887 = vld [vmem:[#allocation7 + $0xe0] sm:$0xff]
    %v888 = vld [vmem:[#allocation7 + $0xe8] sm:$0xff]
    %v889 = vld [vmem:[#allocation7 + $0xf0] sm:$0xff]
    %v890 = vld [vmem:[#allocation7 + $0xf8] sm:$0xff]
    %v891 = vld [vmem:[#allocation7 + $0x100] sm:$0xff]
    %v892 = vld [vmem:[#allocation7 + $0x108] sm:$0xff]
    %v893 = vld [vmem:[#allocation7 + $0x110] sm:$0xff]
    %v894 = vld [vmem:[#allocation7 + $0x118] sm:$0xff]
    %v895 = vld [vmem:[#allocation7 + $0x120] sm:$0xff]
    %v896 = vld [vmem:[#allocation7 + $0x128] sm:$0xff]
    %v897 = vld [vmem:[#allocation7 + $0x130] sm:$0xff]
    %v898 = vld [vmem:[#allocation7 + $0x138] sm:$0xff]
    %v899 = vld [vmem:[#allocation7 + $0x140] sm:$0xff]
    %v900 = vld [vmem:[#allocation7 + $0x148] sm:$0xff]
    %v901 = vld [vmem:[#allocation7 + $0x150] sm:$0xff]
    %v902 = vld [vmem:[#allocation7 + $0x158] sm:$0xff]
    %v903 = vld [vmem:[#allocation7 + $0x160] sm:$0xff]
    %v904 = vld [vmem:[#allocation7 + $0x168] sm:$0xff]
    %v905 = vld [vmem:[#allocation7 + $0x170] sm:$0xff]
    %v906 = vld [vmem:[#allocation7 + $0x178] sm:$0xff]
    %v907 = vld [vmem:[#allocation7 + $0x180] sm:$0xff]
    %v908 = vld [vmem:[#allocation7 + $0x188] sm:$0xff]
    %v909 = vld [vmem:[#allocation7 + $0x190] sm:$0xff]
    %v910 = vld [vmem:[#allocation7 + $0x198] sm:$0xff]
    %v911 = vld [vmem:[#allocation7 + $0x1a0] sm:$0xff]
    %v912 = vld [vmem:[#allocation7 + $0x1a8] sm:$0xff]
    %v913 = vld [vmem:[#allocation7 + $0x1b0] sm:$0xff]
    %v914 = vld [vmem:[#allocation7 + $0x1b8] sm:$0xff]
    %v915 = vld [vmem:[#allocation7 + $0x1c0] sm:$0xff]
    %v916 = vld [vmem:[#allocation7 + $0x1c8] sm:$0xff]
    %v917 = vld [vmem:[#allocation7 + $0x1d0] sm:$0xff]
    %v918 = vld [vmem:[#allocation7 + $0x1d8] sm:$0xff]
    %v919 = vld [vmem:[#allocation7 + $0x1e0] sm:$0xff]
    %v920 = vld [vmem:[#allocation7 + $0x1e8] sm:$0xff]
    %v921 = vld [vmem:[#allocation7 + $0x1f0] sm:$0xff]
    %v922 = vld [vmem:[#allocation7 + $0x1f8] sm:$0xff]
    %v923 = vld [vmem:[#allocation8] sm:$0xff]
    %v925 = vlaneseq
    %v926 = vshrl.u32 %v925, 7
    %v927 = vsub.s32 0, %v926
    %v928 = vrot.slane %v923, %v927
    %v929 = vlaneseq
    %v930 = vshrl.u32 %v929, 7
    %v931 = vsub.s32 1, %v930
    %v932 = vrot.slane %v923, %v931
    %v933 = vlaneseq
    %v934 = vshrl.u32 %v933, 7
    %v935 = vsub.s32 2, %v934
    %v936 = vrot.slane %v923, %v935
    %v937 = vlaneseq
    %v938 = vshrl.u32 %v937, 7
    %v939 = vsub.s32 3, %v938
    %v940 = vrot.slane %v923, %v939
    %v941 = vlaneseq
    %v942 = vshrl.u32 %v941, 7
    %v943 = vsub.s32 4, %v942
    %v944 = vrot.slane %v923, %v943
    %v945 = vlaneseq
    %v946 = vshrl.u32 %v945, 7
    %v947 = vsub.s32 5, %v946
    %v948 = vrot.slane %v923, %v947
    %v949 = vlaneseq
    %v950 = vshrl.u32 %v949, 7
    %v951 = vsub.s32 6, %v950
    %v952 = vrot.slane %v923, %v951
    %v953 = vlaneseq
    %v954 = vshrl.u32 %v953, 7
    %v955 = vsub.s32 7, %v954
    %v956 = vrot.slane %v923, %v955
    %v1029 = vunpack.c.l.b16 %v859
    %v1030 = vunpack.c.h.b16 %v859
    %v1031 = vunpack.c.l.b16 %v860
    %v1032 = vunpack.c.h.b16 %v860
    %v1033 = vunpack.c.l.b16 %v861
    %v1034 = vunpack.c.h.b16 %v861
    %v1035 = vunpack.c.l.b16 %v862
    %v1036 = vunpack.c.h.b16 %v862
    %v1037 = vunpack.c.l.b16 %v863
    %v1038 = vunpack.c.h.b16 %v863
    %v1039 = vunpack.c.l.b16 %v864
    %v1040 = vunpack.c.h.b16 %v864
    %v1041 = vunpack.c.l.b16 %v865
    %v1042 = vunpack.c.h.b16 %v865
    %v1043 = vunpack.c.l.b16 %v866
    %v1044 = vunpack.c.h.b16 %v866
    %v1045 = vunpack.c.l.b16 %v867
    %v1046 = vunpack.c.h.b16 %v867
    %v1047 = vunpack.c.l.b16 %v868
    %v1048 = vunpack.c.h.b16 %v868
    %v1049 = vunpack.c.l.b16 %v869
    %v1050 = vunpack.c.h.b16 %v869
    %v1051 = vunpack.c.l.b16 %v870
    %v1052 = vunpack.c.h.b16 %v870
    %v1053 = vunpack.c.l.b16 %v871
    %v1054 = vunpack.c.h.b16 %v871
    %v1055 = vunpack.c.l.b16 %v872
    %v1056 = vunpack.c.h.b16 %v872
    %v1057 = vunpack.c.l.b16 %v873
    %v1058 = vunpack.c.h.b16 %v873
    %v1059 = vunpack.c.l.b16 %v874
    %v1060 = vunpack.c.h.b16 %v874
    %v1061 = vunpack.c.l.b16 %v875
    %v1062 = vunpack.c.h.b16 %v875
    %v1063 = vunpack.c.l.b16 %v876
    %v1064 = vunpack.c.h.b16 %v876
    %v1065 = vunpack.c.l.b16 %v877
    %v1066 = vunpack.c.h.b16 %v877
    %v1067 = vunpack.c.l.b16 %v878
    %v1068 = vunpack.c.h.b16 %v878
    %v1069 = vunpack.c.l.b16 %v879
    %v1070 = vunpack.c.h.b16 %v879
    %v1071 = vunpack.c.l.b16 %v880
    %v1072 = vunpack.c.h.b16 %v880
    %v1073 = vunpack.c.l.b16 %v881
    %v1074 = vunpack.c.h.b16 %v881
    %v1075 = vunpack.c.l.b16 %v882
    %v1076 = vunpack.c.h.b16 %v882
    %v1077 = vunpack.c.l.b16 %v883
    %v1078 = vunpack.c.h.b16 %v883
    %v1079 = vunpack.c.l.b16 %v884
    %v1080 = vunpack.c.h.b16 %v884
    %v1081 = vunpack.c.l.b16 %v885
    %v1082 = vunpack.c.h.b16 %v885
    %v1083 = vunpack.c.l.b16 %v886
    %v1084 = vunpack.c.h.b16 %v886
    %v1085 = vunpack.c.l.b16 %v887
    %v1086 = vunpack.c.h.b16 %v887
    %v1087 = vunpack.c.l.b16 %v888
    %v1088 = vunpack.c.h.b16 %v888
    %v1089 = vunpack.c.l.b16 %v889
    %v1090 = vunpack.c.h.b16 %v889
    %v1091 = vunpack.c.l.b16 %v890
    %v1092 = vunpack.c.h.b16 %v890
    %v1093 = vunpack.c.l.b16 %v891
    %v1094 = vunpack.c.h.b16 %v891
    %v1095 = vunpack.c.l.b16 %v892
    %v1096 = vunpack.c.h.b16 %v892
    %v1097 = vunpack.c.l.b16 %v893
    %v1098 = vunpack.c.h.b16 %v893
    %v1099 = vunpack.c.l.b16 %v894
    %v1100 = vunpack.c.h.b16 %v894
    %v1101 = vunpack.c.l.b16 %v895
    %v1102 = vunpack.c.h.b16 %v895
    %v1103 = vunpack.c.l.b16 %v896
    %v1104 = vunpack.c.h.b16 %v896
    %v1105 = vunpack.c.l.b16 %v897
    %v1106 = vunpack.c.h.b16 %v897
    %v1107 = vunpack.c.l.b16 %v898
    %v1108 = vunpack.c.h.b16 %v898
    %v1109 = vunpack.c.l.b16 %v899
    %v1110 = vunpack.c.h.b16 %v899
    %v1111 = vunpack.c.l.b16 %v900
    %v1112 = vunpack.c.h.b16 %v900
    %v1113 = vunpack.c.l.b16 %v901
    %v1114 = vunpack.c.h.b16 %v901
    %v1115 = vunpack.c.l.b16 %v902
    %v1116 = vunpack.c.h.b16 %v902
    %v1117 = vunpack.c.l.b16 %v903
    %v1118 = vunpack.c.h.b16 %v903
    %v1119 = vunpack.c.l.b16 %v904
    %v1120 = vunpack.c.h.b16 %v904
    %v1121 = vunpack.c.l.b16 %v905
    %v1122 = vunpack.c.h.b16 %v905
    %v1123 = vunpack.c.l.b16 %v906
    %v1124 = vunpack.c.h.b16 %v906
    %v1125 = vunpack.c.l.b16 %v907
    %v1126 = vunpack.c.h.b16 %v907
    %v1127 = vunpack.c.l.b16 %v908
    %v1128 = vunpack.c.h.b16 %v908
    %v1129 = vunpack.c.l.b16 %v909
    %v1130 = vunpack.c.h.b16 %v909
    %v1131 = vunpack.c.l.b16 %v910
    %v1132 = vunpack.c.h.b16 %v910
    %v1133 = vunpack.c.l.b16 %v911
    %v1134 = vunpack.c.h.b16 %v911
    %v1135 = vunpack.c.l.b16 %v912
    %v1136 = vunpack.c.h.b16 %v912
    %v1137 = vunpack.c.l.b16 %v913
    %v1138 = vunpack.c.h.b16 %v913
    %v1139 = vunpack.c.l.b16 %v914
    %v1140 = vunpack.c.h.b16 %v914
    %v1141 = vunpack.c.l.b16 %v915
    %v1142 = vunpack.c.h.b16 %v915
    %v1143 = vunpack.c.l.b16 %v916
    %v1144 = vunpack.c.h.b16 %v916
    %v1145 = vunpack.c.l.b16 %v917
    %v1146 = vunpack.c.h.b16 %v917
    %v1147 = vunpack.c.l.b16 %v918
    %v1148 = vunpack.c.h.b16 %v918
    %v1149 = vunpack.c.l.b16 %v919
    %v1150 = vunpack.c.h.b16 %v919
    %v1151 = vunpack.c.l.b16 %v920
    %v1152 = vunpack.c.h.b16 %v920
    %v1153 = vunpack.c.l.b16 %v921
    %v1154 = vunpack.c.h.b16 %v921
    %v1155 = vunpack.c.l.b16 %v922
    %v1156 = vunpack.c.h.b16 %v922
    %v1157 = vpack.c.b16 %v1037, %v1029
    %v1158 = vpack.c.b16 %v1038, %v1030
    %v1159 = vpack.c.b16 %v1039, %v1031
    %v1160 = vpack.c.b16 %v1040, %v1032
    %v1161 = vpack.c.b16 %v1041, %v1033
    %v1162 = vpack.c.b16 %v1042, %v1034
    %v1163 = vpack.c.b16 %v1043, %v1035
    %v1164 = vpack.c.b16 %v1044, %v1036
    %v1165 = vpack.c.b16 %v1053, %v1045
    %v1166 = vpack.c.b16 %v1054, %v1046
    %v1167 = vpack.c.b16 %v1055, %v1047
    %v1168 = vpack.c.b16 %v1056, %v1048
    %v1169 = vpack.c.b16 %v1057, %v1049
    %v1170 = vpack.c.b16 %v1058, %v1050
    %v1171 = vpack.c.b16 %v1059, %v1051
    %v1172 = vpack.c.b16 %v1060, %v1052
    %v1173 = vpack.c.b16 %v1069, %v1061
    %v1174 = vpack.c.b16 %v1070, %v1062
    %v1175 = vpack.c.b16 %v1071, %v1063
    %v1176 = vpack.c.b16 %v1072, %v1064
    %v1177 = vpack.c.b16 %v1073, %v1065
    %v1178 = vpack.c.b16 %v1074, %v1066
    %v1179 = vpack.c.b16 %v1075, %v1067
    %v1180 = vpack.c.b16 %v1076, %v1068
    %v1181 = vpack.c.b16 %v1085, %v1077
    %v1182 = vpack.c.b16 %v1086, %v1078
    %v1183 = vpack.c.b16 %v1087, %v1079
    %v1184 = vpack.c.b16 %v1088, %v1080
    %v1185 = vpack.c.b16 %v1089, %v1081
    %v1186 = vpack.c.b16 %v1090, %v1082
    %v1187 = vpack.c.b16 %v1091, %v1083
    %v1188 = vpack.c.b16 %v1092, %v1084
    %v1189 = vpack.c.b16 %v1101, %v1093
    %v1190 = vpack.c.b16 %v1102, %v1094
    %v1191 = vpack.c.b16 %v1103, %v1095
    %v1192 = vpack.c.b16 %v1104, %v1096
    %v1193 = vpack.c.b16 %v1105, %v1097
    %v1194 = vpack.c.b16 %v1106, %v1098
    %v1195 = vpack.c.b16 %v1107, %v1099
    %v1196 = vpack.c.b16 %v1108, %v1100
    %v1197 = vpack.c.b16 %v1117, %v1109
    %v1198 = vpack.c.b16 %v1118, %v1110
    %v1199 = vpack.c.b16 %v1119, %v1111
    %v1200 = vpack.c.b16 %v1120, %v1112
    %v1201 = vpack.c.b16 %v1121, %v1113
    %v1202 = vpack.c.b16 %v1122, %v1114
    %v1203 = vpack.c.b16 %v1123, %v1115
    %v1204 = vpack.c.b16 %v1124, %v1116
    %v1205 = vpack.c.b16 %v1133, %v1125
    %v1206 = vpack.c.b16 %v1134, %v1126
    %v1207 = vpack.c.b16 %v1135, %v1127
    %v1208 = vpack.c.b16 %v1136, %v1128
    %v1209 = vpack.c.b16 %v1137, %v1129
    %v1210 = vpack.c.b16 %v1138, %v1130
    %v1211 = vpack.c.b16 %v1139, %v1131
    %v1212 = vpack.c.b16 %v1140, %v1132
    %v1213 = vpack.c.b16 %v1149, %v1141
    %v1214 = vpack.c.b16 %v1150, %v1142
    %v1215 = vpack.c.b16 %v1151, %v1143
    %v1216 = vpack.c.b16 %v1152, %v1144
    %v1217 = vpack.c.b16 %v1153, %v1145
    %v1218 = vpack.c.b16 %v1154, %v1146
    %v1219 = vpack.c.b16 %v1155, %v1147
    %v1220 = vpack.c.b16 %v1156, %v1148
    %1285 = vmatprep.subr.bf16.mxu0 %v1214
    %1286 = vmatpush1.bf16.msra.mxu0 %v1213
    %1287 = vmatprep.subr.bf16.mxu0 %v1206
    %1288 = vmatpush1.bf16.msra.mxu0 %v1205
    %1289 = vmatprep.subr.bf16.mxu0 %v1198
    %1290 = vmatpush1.bf16.msra.mxu0 %v1197
    %1291 = vmatprep.subr.bf16.mxu0 %v1190
    %1292 = vmatpush1.bf16.msra.mxu0 %v1189
    %1293 = vmatprep.subr.bf16.mxu0 %v1182
    %1294 = vmatpush1.bf16.msra.mxu0 %v1181
    %1295 = vmatprep.subr.bf16.mxu0 %v1174
    %1296 = vmatpush1.bf16.msra.mxu0 %v1173
    %1297 = vmatprep.subr.bf16.mxu0 %v1166
    %1298 = vmatpush1.bf16.msra.mxu0 %v1165
    %1299 = vmatprep.subr.bf16.mxu0 %v1158
    %1300 = vmatpush1.bf16.msra.mxu0 %v1157
    %1301 = vmatprep.subr.bf16.mxu0 0
    %1302 = vmatpush2.bf16.msra.mxu0 0
    %1303 = vmatprep.subr.bf16.mxu0 0
    %1304 = vmatpush2.bf16.msra.mxu0 0
    %1305 = vmatprep.subr.bf16.mxu0 0
    %1306 = vmatpush2.bf16.msra.mxu0 0
    %1307 = vmatprep.subr.bf16.mxu0 0
    %1308 = vmatpush2.bf16.msra.mxu0 0
    %1309 = vmatprep.subr.bf16.mxu0 0
    %1310 = vmatpush2.bf16.msra.mxu0 0
    %1311 = vmatprep.subr.bf16.mxu0 0
    %1312 = vmatpush2.bf16.msra.mxu0 0
    %1313 = vmatprep.subr.bf16.mxu0 0
    %1314 = vmatpush2.bf16.msra.mxu0 0
    %1315 = vmatprep.subr.bf16.mxu0 0
    %1316 = vmatpush2.bf16.msra.mxu0 0
    %1317 = vmatprep.mubr.bf16.mxu0 0
    %1318 = vmatmul.mubr.bf16.gmra.mxu0 %v858
    %v1319 = vpop.f32.mrf.mxu0
    %v1320 = vadd.f32 %v928, %v1319
    %v1321 = vpop.f32.mrf.mxu0
    %v1322 = vadd.f32 %v932, %v1321
    %v1323 = vpop.f32.mrf.mxu0
    %v1324 = vpop.f32.mrf.mxu0
    %1325 = vdwg.mxu0
    %1326 = vmatprep.subr.bf16.mxu0 %v1216
    %1327 = vmatpush1.bf16.msra.mxu0 %v1215
    %1328 = vmatprep.subr.bf16.mxu0 %v1208
    %1329 = vmatpush1.bf16.msra.mxu0 %v1207
    %1330 = vmatprep.subr.bf16.mxu0 %v1200
    %1331 = vmatpush1.bf16.msra.mxu0 %v1199
    %1332 = vmatprep.subr.bf16.mxu0 %v1192
    %1333 = vmatpush1.bf16.msra.mxu0 %v1191
    %1334 = vmatprep.subr.bf16.mxu0 %v1184
    %1335 = vmatpush1.bf16.msra.mxu0 %v1183
    %1336 = vmatprep.subr.bf16.mxu0 %v1176
    %1337 = vmatpush1.bf16.msra.mxu0 %v1175
    %1338 = vmatprep.subr.bf16.mxu0 %v1168
    %1339 = vmatpush1.bf16.msra.mxu0 %v1167
    %1340 = vmatprep.subr.bf16.mxu0 %v1160
    %1341 = vmatpush1.bf16.msra.mxu0 %v1159
    %1342 = vmatprep.subr.bf16.mxu0 0
    %1343 = vmatpush2.bf16.msra.mxu0 0
    %1344 = vmatprep.subr.bf16.mxu0 0
    %1345 = vmatpush2.bf16.msra.mxu0 0
    %1346 = vmatprep.subr.bf16.mxu0 0
    %1347 = vmatpush2.bf16.msra.mxu0 0
    %1348 = vmatprep.subr.bf16.mxu0 0
    %1349 = vmatpush2.bf16.msra.mxu0 0
    %1350 = vmatprep.subr.bf16.mxu0 0
    %1351 = vmatpush2.bf16.msra.mxu0 0
    %1352 = vmatprep.subr.bf16.mxu0 0
    %1353 = vmatpush2.bf16.msra.mxu0 0
    %1354 = vmatprep.subr.bf16.mxu0 0
    %1355 = vmatpush2.bf16.msra.mxu0 0
    %1356 = vmatprep.subr.bf16.mxu0 0
    %1357 = vmatpush2.bf16.msra.mxu0 0
    %1358 = vmatprep.mubr.bf16.mxu0 0
    %1359 = vmatmul.mubr.bf16.gmra.mxu0 %v858
    %v1360 = vpop.f32.mrf.mxu0
    %v1361 = vadd.f32 %v936, %v1360
    %v1362 = vpop.f32.mrf.mxu0
    %v1363 = vadd.f32 %v940, %v1362
    %v1364 = vpop.f32.mrf.mxu0
    %v1365 = vpop.f32.mrf.mxu0
    %1366 = vdwg.mxu0
    %1367 = vmatprep.subr.bf16.mxu0 %v1218
    %1368 = vmatpush1.bf16.msra.mxu0 %v1217
    %1369 = vmatprep.subr.bf16.mxu0 %v1210
    %1370 = vmatpush1.bf16.msra.mxu0 %v1209
    %1371 = vmatprep.subr.bf16.mxu0 %v1202
    %1372 = vmatpush1.bf16.msra.mxu0 %v1201
    %1373 = vmatprep.subr.bf16.mxu0 %v1194
    %1374 = vmatpush1.bf16.msra.mxu0 %v1193
    %1375 = vmatprep.subr.bf16.mxu0 %v1186
    %1376 = vmatpush1.bf16.msra.mxu0 %v1185
    %1377 = vmatprep.subr.bf16.mxu0 %v1178
    %1378 = vmatpush1.bf16.msra.mxu0 %v1177
    %1379 = vmatprep.subr.bf16.mxu0 %v1170
    %1380 = vmatpush1.bf16.msra.mxu0 %v1169
    %1381 = vmatprep.subr.bf16.mxu0 %v1162
    %1382 = vmatpush1.bf16.msra.mxu0 %v1161
    %1383 = vmatprep.subr.bf16.mxu0 0
    %1384 = vmatpush2.bf16.msra.mxu0 0
    %1385 = vmatprep.subr.bf16.mxu0 0
    %1386 = vmatpush2.bf16.msra.mxu0 0
    %1387 = vmatprep.subr.bf16.mxu0 0
    %1388 = vmatpush2.bf16.msra.mxu0 0
    %1389 = vmatprep.subr.bf16.mxu0 0
    %1390 = vmatpush2.bf16.msra.mxu0 0
    %1391 = vmatprep.subr.bf16.mxu0 0
    %1392 = vmatpush2.bf16.msra.mxu0 0
    %1393 = vmatprep.subr.bf16.mxu0 0
    %1394 = vmatpush2.bf16.msra.mxu0 0
    %1395 = vmatprep.subr.bf16.mxu0 0
    %1396 = vmatpush2.bf16.msra.mxu0 0
    %1397 = vmatprep.subr.bf16.mxu0 0
    %1398 = vmatpush2.bf16.msra.mxu0 0
    %1399 = vmatprep.mubr.bf16.mxu0 0
    %1400 = vmatmul.mubr.bf16.gmra.mxu0 %v858
    %v1401 = vpop.f32.mrf.mxu0
    %v1402 = vadd.f32 %v944, %v1401
    %v1403 = vpop.f32.mrf.mxu0
    %v1404 = vadd.f32 %v948, %v1403
    %v1405 = vpop.f32.mrf.mxu0
    %v1406 = vpop.f32.mrf.mxu0
    %1407 = vdwg.mxu0
    %1408 = vmatprep.subr.bf16.mxu0 %v1220
    %1409 = vmatpush1.bf16.msra.mxu0 %v1219
    %1410 = vmatprep.subr.bf16.mxu0 %v1212
    %1411 = vmatpush1.bf16.msra.mxu0 %v1211
    %1412 = vmatprep.subr.bf16.mxu0 %v1204
    %1413 = vmatpush1.bf16.msra.mxu0 %v1203
    %1414 = vmatprep.subr.bf16.mxu0 %v1196
    %1415 = vmatpush1.bf16.msra.mxu0 %v1195
    %1416 = vmatprep.subr.bf16.mxu0 %v1188
    %1417 = vmatpush1.bf16.msra.mxu0 %v1187
    %1418 = vmatprep.subr.bf16.mxu0 %v1180
    %1419 = vmatpush1.bf16.msra.mxu0 %v1179
    %1420 = vmatprep.subr.bf16.mxu0 %v1172
    %1421 = vmatpush1.bf16.msra.mxu0 %v1171
    %1422 = vmatprep.subr.bf16.mxu0 %v1164
    %1423 = vmatpush1.bf16.msra.mxu0 %v1163
    %1424 = vmatprep.subr.bf16.mxu0 0
    %1425 = vmatpush2.bf16.msra.mxu0 0
    %1426 = vmatprep.subr.bf16.mxu0 0
    %1427 = vmatpush2.bf16.msra.mxu0 0
    %1428 = vmatprep.subr.bf16.mxu0 0
    %1429 = vmatpush2.bf16.msra.mxu0 0
    %1430 = vmatprep.subr.bf16.mxu0 0
    %1431 = vmatpush2.bf16.msra.mxu0 0
    %1432 = vmatprep.subr.bf16.mxu0 0
    %1433 = vmatpush2.bf16.msra.mxu0 0
    %1434 = vmatprep.subr.bf16.mxu0 0
    %1435 = vmatpush2.bf16.msra.mxu0 0
    %1436 = vmatprep.subr.bf16.mxu0 0
    %1437 = vmatpush2.bf16.msra.mxu0 0
    %1438 = vmatprep.subr.bf16.mxu0 0
    %1439 = vmatpush2.bf16.msra.mxu0 0
    %1440 = vmatprep.mubr.bf16.mxu0 0
    %1441 = vmatmul.mubr.bf16.gmra.mxu0 %v858
    %v1442 = vpop.f32.mrf.mxu0
    %v1443 = vadd.f32 %v952, %v1442
    %v1444 = vpop.f32.mrf.mxu0
    %v1445 = vadd.f32 %v956, %v1444
    %v1446 = vpop.f32.mrf.mxu0
    %v1447 = vpop.f32.mrf.mxu0
    %1448 = vdwg.mxu0
    %v1457 = vcombine.low %v1320, %v1322
    %v1458 = vcombine.high %v1320, %v1322
    %v1459 = vcombine.low %v1361, %v1363
    %v1460 = vcombine.high %v1361, %v1363
    %v1462 = vunpack.c.l.s4 1983009808
    %v1463 = vunpack.c.0.s8 %v1462
    %v1464 = vlaneseq
    %v1465 = vshrl.u32 %v1464, 7
    %v1466 = vsub.s32 %v1463, %v1465
    %v1467 = vrot.slane %v1457, %v1466
    %v1469 = vunpack.c.l.s4 1983009808
    %v1470 = vunpack.c.0.s8 %v1469
    %v1471 = vlaneseq
    %v1472 = vshrl.u32 %v1471, 7
    %v1473 = vsub.s32 %v1470, %v1472
    %v1474 = vrot.slane %v1458, %v1473
    %v1476 = vunpack.c.l.s4 1983009808
    %v1477 = vunpack.c.0.s8 %v1476
    %v1478 = vlaneseq
    %v1479 = vshrl.u32 %v1478, 7
    %v1480 = vsub.s32 %v1477, %v1479
    %v1481 = vrot.slane %v1459, %v1480
    %v1483 = vunpack.c.l.s4 1983009808
    %v1484 = vunpack.c.0.s8 %v1483
    %v1485 = vlaneseq
    %v1486 = vshrl.u32 %v1485, 7
    %v1487 = vsub.s32 %v1484, %v1486
    %v1488 = vrot.slane %v1460, %v1487
    %v1489 = vcombine.low %v1467, %v1481
    %v1490 = vcombine.high %v1467, %v1481
    %v1491 = vcombine.low %v1474, %v1488
    %v1492 = vcombine.high %v1474, %v1488
    %v1493 = vcombine.low %v1402, %v1404
    %v1494 = vcombine.high %v1402, %v1404
    %v1495 = vcombine.low %v1443, %v1445
    %v1496 = vcombine.high %v1443, %v1445
    %v1498 = vunpack.c.l.s4 1983009808
    %v1499 = vunpack.c.0.s8 %v1498
    %v1500 = vlaneseq
    %v1501 = vshrl.u32 %v1500, 7
    %v1502 = vsub.s32 %v1499, %v1501
    %v1503 = vrot.slane %v1493, %v1502
    %v1505 = vunpack.c.l.s4 1983009808
    %v1506 = vunpack.c.0.s8 %v1505
    %v1507 = vlaneseq
    %v1508 = vshrl.u32 %v1507, 7
    %v1509 = vsub.s32 %v1506, %v1508
    %v1510 = vrot.slane %v1494, %v1509
    %v1512 = vunpack.c.l.s4 1983009808
    %v1513 = vunpack.c.0.s8 %v1512
    %v1514 = vlaneseq
    %v1515 = vshrl.u32 %v1514, 7
    %v1516 = vsub.s32 %v1513, %v1515
    %v1517 = vrot.slane %v1495, %v1516
    %v1519 = vunpack.c.l.s4 1983009808
    %v1520 = vunpack.c.0.s8 %v1519
    %v1521 = vlaneseq
    %v1522 = vshrl.u32 %v1521, 7
    %v1523 = vsub.s32 %v1520, %v1522
    %v1524 = vrot.slane %v1496, %v1523
    %v1525 = vcombine.low %v1503, %v1517
    %v1526 = vcombine.high %v1503, %v1517
    %v1527 = vcombine.low %v1510, %v1524
    %v1528 = vcombine.high %v1510, %v1524
    %1537 = vst [vmem:[#allocation10] sm:$0xff] %v1489
    %1538 = vst [vmem:[#allocation10 + $0x8] sm:$0xff] %v1525
    %1539 = vst [vmem:[#allocation10 + $0x10] sm:$0xff] %v1490
    %1540 = vst [vmem:[#allocation10 + $0x18] sm:$0xff] %v1526
    %1541 = vst [vmem:[#allocation10 + $0x20] sm:$0xff] %v1491
    %1542 = vst [vmem:[#allocation10 + $0x28] sm:$0xff] %v1527
    %1543 = vst [vmem:[#allocation10 + $0x30] sm:$0xff] %v1492
    %1544 = vst [vmem:[#allocation10 + $0x38] sm:$0xff] %v1528
    // Predicated region
    $region38: #{tpu_custom_call.1} parent=1 // pred_check
      _
    $region39: #{tpu_custom_call.1} parent=1 // pred_check_branch
      %1546 = sbr.rel (0) target = $region41
    $region40: #{tpu_custom_call.1} parent=1 // pred_region
      %s1548 = ssub.s32 1024, 256
      %1549 = vsyncadd [#allocation4], %s1548
      %s1550 = sshll.u32 [#allocation10], 4
      %s1551 = int_to_ptr.vmem [resolvable:$true] %s1550
      %1556 = dma.vmem_to_hbm [thread:$0]  %s1551, 256, %s5, [#allocation4], 256, 256, 16
    $region41: #{tpu_custom_call.1} parent=1 // pred_fallthru
      _
    // Predicated region
    $region42: #{tpu_custom_call.1} parent=1 // pred_check
      _
    $region43: #{tpu_custom_call.1} parent=1 // pred_check_branch
      %1558 = sbr.rel (0) target = $region45
    $region44: #{tpu_custom_call.1} parent=1 // pred_region
      %1559 = dma.done [#allocation4], 1024
    $region45: #{tpu_custom_call.1} parent=1 // pred_fallthru
      _
    %1560 = vsyncpa [#allocation3], 1
    %1561 = vsyncpa [#allocation6], 1
    %1562 = vsyncpa [#allocation9], 1
    %1563 = vsyncpa [#allocation4], 1

</llo_original>
